<compile_context>
chip_gen: v5e
topology: v5e:2x2
jax: 0.10.0
libtpu: 0.0.40
codegen_flags: <defaults>
</compile_context>

<pallas_src>
import functools

import jax
import jax.numpy as jnp
from jax import lax
from jax.experimental import pallas as pl
from jax.experimental.pallas import tpu as pltpu


# ----------------------------------------------------------------------------
# Kernels: one (batch_block, C, TILE_HW) tile per grid step; normalize over C.
# ----------------------------------------------------------------------------
def _layernorm_withbias_kernel(x_ref, w_ref, b_ref, o_ref, *, eps):
    x = x_ref[...].astype(jnp.float32)                 # [NB, C, THW]
    mu = jnp.mean(x, axis=1, keepdims=True)            # [NB, 1, THW]
    xc = x - mu
    var = jnp.mean(xc * xc, axis=1, keepdims=True)     # population variance
    inv = lax.rsqrt(var + eps)                         # EUP rsqrt
    w = w_ref[...].astype(jnp.float32)                 # [C, 1] broadcasts
    b = b_ref[...].astype(jnp.float32)
    o_ref[...] = (xc * inv * w + b).astype(o_ref.dtype)


def _layernorm_biasfree_kernel(x_ref, w_ref, o_ref, *, eps):
    x = x_ref[...].astype(jnp.float32)                 # [NB, C, THW]
    mu = jnp.mean(x, axis=1, keepdims=True)
    xc = x - mu
    var = jnp.mean(xc * xc, axis=1, keepdims=True)     # two-pass: more stable
    inv = lax.rsqrt(var + eps)
    w = w_ref[...].astype(jnp.float32)
    # BiasFree: x / sqrt(var + eps) * w   (mean NOT subtracted in the output)
    o_ref[...] = (x * inv * w).astype(o_ref.dtype)


# ----------------------------------------------------------------------------
# Block-size selection helpers (trace-time Python; static per shape).
# ----------------------------------------------------------------------------
_TARGET_BLOCK_BYTES = 2 << 20   # ~2 MiB per block; 4 live buffers << 16 MiB


def _pick_tile_hw(HW, C, itemsize):
    """Largest multiple-of-128 divisor of HW keeping C*tile under budget."""
    if HW % 128 != 0:
        # TODO(synk): ragged HW (not a multiple of 128) falls back to a single
        # full-HW block (correct, but stores become masked vst.msk).
        return HW
    max_lanes = max(128, _TARGET_BLOCK_BYTES // max(1, C * itemsize))
    best = 128
    for t in range(128, HW + 1, 128):
        if HW % t == 0 and t <= max_lanes:
            best = t
    return best


def _pick_batch_block(N, bytes_per_image_tile):
    """Largest divisor of N whose combined block stays under budget."""
    best = 1
    for b in range(1, N + 1):
        if N % b == 0 and b * bytes_per_image_tile <= _TARGET_BLOCK_BYTES:
            best = b
    return best


# ----------------------------------------------------------------------------
# Wrapper
# ----------------------------------------------------------------------------
def layernorm_forward_pallas(x_nchw, weight, bias=None, *,
                             layernorm_type="WithBias", eps=1e-5):
    """LayerNorm forward matching the PyTorch LayerNorm module.

    x_nchw: [N, C, H, W]; weight: [C]; bias: [C] (ignored / may be None for
    the BiasFree variant).
    """
    N, C, H, W = x_nchw.shape
    HW = H * W
    itemsize = jnp.dtype(x_nchw.dtype).itemsize

    tile_hw = _pick_tile_hw(HW, C, itemsize)
    batch_block = _pick_batch_block(N, C * tile_hw * itemsize)
    grid = (N // batch_block, HW // tile_hw)

    # Free reshapes only -- no transposes, no padding, no extra HBM passes.
    x = x_nchw.reshape(N, C, HW)
    w = weight.reshape(C, 1)

    x_spec = pl.BlockSpec((batch_block, C, tile_hw), lambda n, h: (n, 0, h))
    w_spec = pl.BlockSpec((C, 1), lambda n, h: (0, 0))
    out_spec = pl.BlockSpec((batch_block, C, tile_hw), lambda n, h: (n, 0, h))

    with_bias = (layernorm_type != "BiasFree")
    if with_bias:
        kernel = functools.partial(_layernorm_withbias_kernel, eps=eps)
        in_specs = [x_spec, w_spec, pl.BlockSpec((C, 1), lambda n, h: (0, 0))]
        operands = (x, w, bias.reshape(C, 1))
    else:
        kernel = functools.partial(_layernorm_biasfree_kernel, eps=eps)
        in_specs = [x_spec, w_spec]
        operands = (x, w)

    out = pl.pallas_call(
        kernel,
        out_shape=jax.ShapeDtypeStruct((N, C, HW), x_nchw.dtype),
        grid_spec=pltpu.PrefetchScalarGridSpec(
            num_scalar_prefetch=0,
            grid=grid,
            in_specs=in_specs,
            out_specs=out_spec,
        ),
        compiler_params=pltpu.CompilerParams(
            # Batch tiles and HW tiles are fully independent -> both parallel
            # (shards across v7x's two TensorCores even at N=1).
            dimension_semantics=("parallel", "parallel")),
    )(*operands)

    return out.reshape(N, C, H, W)


# ----------------------------------------------------------------------------
# Pure-JAX reference mirroring the PyTorch to_3d / LayerNorm / to_4d path.
# ----------------------------------------------------------------------------
def layernorm_forward_reference(x_nchw, weight, bias=None, *,
                                layernorm_type="WithBias", eps=1e-5):
    N, C, H, W = x_nchw.shape
    x3 = jnp.transpose(x_nchw.reshape(N, C, H * W), (0, 2, 1))   # [N, HW, C]
    mu = jnp.mean(x3, axis=-1, keepdims=True)
    var = jnp.mean((x3 - mu) ** 2, axis=-1, keepdims=True)
    if layernorm_type == "BiasFree":
        y = x3 / jnp.sqrt(var + eps) * weight
    else:
        y = (x3 - mu) / jnp.sqrt(var + eps) * weight + bias
    return jnp.transpose(y, (0, 2, 1)).reshape(N, C, H, W)


if __name__ == "__main__":
    # Small shapes consistent with the module: N=2, C=4 channels, 16x16 spatial.
    N, C, H, W = 2, 4, 16, 16

    key = jax.random.PRNGKey(0)
    kx, kw, kb = jax.random.split(key, 3)
    x = jax.random.normal(kx, (N, C, H, W), jnp.float32)
    # Random affine params to exercise the scale/shift paths (PyTorch inits to
    # 1/0, which would hide bugs in the weight/bias handling).
    weight = 1.0 + 0.1 * jax.random.normal(kw, (C,), jnp.float32)
    bias = 0.1 * jax.random.normal(kb, (C,), jnp.float32)

    ok = True
    for ln_type in ("WithBias", "BiasFree"):
        run = jax.jit(functools.partial(layernorm_forward_pallas,
                                        layernorm_type=ln_type))
        b_arg = bias if ln_type == "WithBias" else None
        out = jax.block_until_ready(run(x, weight, b_arg))
        ref = jax.block_until_ready(
            layernorm_forward_reference(x, weight, b_arg,
                                        layernorm_type=ln_type))
        assert out.shape == (N, C, H, W)
        err = float(jnp.max(jnp.abs(out - ref)))
        if err > 1e-4:
            ok = False
            print(f"{ln_type}: max abs err {err}")

    assert ok, "Pallas LayerNorm mismatch vs reference"
    print("KERNEL_OK")
</pallas_src>

<mosaic_0001>
module attributes {stable_mosaic.version = 11 : i64} {
  func.func @_layernorm_withbias_kernel(%arg0: i32, %arg1: i32, %arg2: memref<2x4x256xf32, #tpu.memory_space<vmem>>, %arg3: memref<4x1xf32, #tpu.memory_space<vmem>>, %arg4: memref<4x1xf32, #tpu.memory_space<vmem>>, %arg5: memref<2x4x256xf32, #tpu.memory_space<vmem>>) attributes {dimension_semantics = [#tpu.dimension_semantics<parallel>, #tpu.dimension_semantics<parallel>], iteration_bounds = array<i64: 1, 1>, scalar_prefetch = 0 : i64, scratch_operands = 0 : i64, tpu.core_type = #tpu.core_type<tc>, window_params = [{transform_indices = @transform_0, window_bounds = array<i64: 2, 4, 256>}, {pipeline_mode = #tpu.pipeline_mode<synchronous>, transform_indices = @transform_1, window_bounds = array<i64: 4, 1>}, {pipeline_mode = #tpu.pipeline_mode<synchronous>, transform_indices = @transform_2, window_bounds = array<i64: 4, 1>}, {transform_indices = @transform_3, window_bounds = array<i64: 2, 4, 256>}]} {
    %c0 = arith.constant 0 : index
    %c0_0 = arith.constant 0 : index
    %c0_1 = arith.constant 0 : index
    %0 = vector.load %arg2[%c0, %c0_0, %c0_1] : memref<2x4x256xf32, #tpu.memory_space<vmem>>, vector<2x4x256xf32>
    %cst = arith.constant dense<0.000000e+00> : vector<2x256xf32>
    %1 = vector.multi_reduction <add>, %0, %cst [1] : vector<2x4x256xf32> to vector<2x256xf32>
    %2 = vector.shape_cast %1 : vector<2x256xf32> to vector<2x1x256xf32>
    %cst_2 = arith.constant 4.000000e+00 : f32
    %3 = vector.broadcast %cst_2 : f32 to vector<2x1x256xf32>
    %4 = arith.divf %2, %3 : vector<2x1x256xf32>
    %5 = vector.broadcast %4 : vector<2x1x256xf32> to vector<2x4x256xf32>
    %6 = arith.subf %0, %5 : vector<2x4x256xf32>
    %7 = arith.mulf %6, %6 : vector<2x4x256xf32>
    %cst_3 = arith.constant dense<0.000000e+00> : vector<2x256xf32>
    %8 = vector.multi_reduction <add>, %7, %cst_3 [1] : vector<2x4x256xf32> to vector<2x256xf32>
    %9 = vector.shape_cast %8 : vector<2x256xf32> to vector<2x1x256xf32>
    %cst_4 = arith.constant 4.000000e+00 : f32
    %10 = vector.broadcast %cst_4 : f32 to vector<2x1x256xf32>
    %11 = arith.divf %9, %10 : vector<2x1x256xf32>
    %cst_5 = arith.constant 9.99999974E-6 : f32
    %12 = vector.broadcast %cst_5 : f32 to vector<2x1x256xf32>
    %13 = arith.addf %11, %12 : vector<2x1x256xf32>
    %14 = math.rsqrt %13 : vector<2x1x256xf32>
    %c0_6 = arith.constant 0 : index
    %c0_7 = arith.constant 0 : index
    %15 = vector.load %arg3[%c0_6, %c0_7] : memref<4x1xf32, #tpu.memory_space<vmem>>, vector<4x1xf32>
    %c0_8 = arith.constant 0 : index
    %c0_9 = arith.constant 0 : index
    %16 = vector.load %arg4[%c0_8, %c0_9] : memref<4x1xf32, #tpu.memory_space<vmem>>, vector<4x1xf32>
    %17 = vector.broadcast %14 : vector<2x1x256xf32> to vector<2x4x256xf32>
    %18 = arith.mulf %6, %17 : vector<2x4x256xf32>
    %19 = vector.shape_cast %15 : vector<4x1xf32> to vector<1x4x1xf32>
    %20 = vector.broadcast %19 : vector<1x4x1xf32> to vector<2x4x256xf32>
    %21 = arith.mulf %18, %20 : vector<2x4x256xf32>
    %22 = vector.shape_cast %16 : vector<4x1xf32> to vector<1x4x1xf32>
    %23 = vector.broadcast %22 : vector<1x4x1xf32> to vector<2x4x256xf32>
    %24 = arith.addf %21, %23 : vector<2x4x256xf32>
    %c0_10 = arith.constant 0 : index
    %c0_11 = arith.constant 0 : index
    %c0_12 = arith.constant 0 : index
    %25 = vector.load %arg5[%c0_10, %c0_11, %c0_12] : memref<2x4x256xf32, #tpu.memory_space<vmem>>, vector<2x4x256xf32>
    tpu.vector_store %arg5[%c0_10, %c0_11, %c0_12], %24 {strides = array<i32>} : memref<2x4x256xf32, #tpu.memory_space<vmem>>, vector<2x4x256xf32>,
    return
  }
  func.func @transform_0(%arg0: i32, %arg1: i32) -> (i32, i32, i32) {
    %c0_i32 = arith.constant 0 : i32
    %c0_i32_0 = arith.constant 0 : i32
    return %arg0, %c0_i32, %arg1 : i32, i32, i32
  }
  func.func @transform_1(%arg0: i32, %arg1: i32) -> (i32, i32) {
    %c0_i32 = arith.constant 0 : i32
    %c0_i32_0 = arith.constant 0 : i32
    %c0_i32_1 = arith.constant 0 : i32
    return %c0_i32, %c0_i32_0 : i32, i32
  }
  func.func @transform_2(%arg0: i32, %arg1: i32) -> (i32, i32) {
    %c0_i32 = arith.constant 0 : i32
    %c0_i32_0 = arith.constant 0 : i32
    %c0_i32_1 = arith.constant 0 : i32
    return %c0_i32, %c0_i32_0 : i32, i32
  }
  func.func @transform_3(%arg0: i32, %arg1: i32) -> (i32, i32, i32) {
    %c0_i32 = arith.constant 0 : i32
    %c0_i32_0 = arith.constant 0 : i32
    return %arg0, %c0_i32, %arg1 : i32, i32, i32
  }
}

</mosaic_0001>

<llo_original>
// kernel: layernorm_forward_pallas.1
$region0: #{layernorm_forward_pallas.1}
  #allocation0 [shape = 'u32[]', space=smem, size = 0x4, offset = 0x4, fixed_abs, tag = 'smem constant byte address 0x4 - core index']
  #allocation1 [shape = 'u32[72,128]{1,0:T(1,128)}', space=vmem, size = 0x9000, scoped, tag = 'internal scratch']
  %s0 = inlined_call_operand.vmem [shape: f32[2,4,256], index: 0, kind: input, shape index: {}]
  %s1 = inlined_call_operand.vmem [shape: f32[4,1], index: 1, kind: input, shape index: {}]
  %s2 = inlined_call_operand.vmem [shape: f32[4,1], index: 2, kind: input, shape index: {}]
  %s3 = inlined_call_operand.vmem [shape: f32[2,4,256], index: 3, kind: output, shape index: {}]
  %s4 = sld [smem:[#allocation0]]
  $region22: #{layernorm_forward_pallas.1} parent=0
    _
  %s6 = ssub.s32 1, %s4
  %s7 = scalar_select 0, %s6, %s4
  // Predicated region
  $region2: #{layernorm_forward_pallas.1} parent=0 // pred_check
    _
  $region3: #{layernorm_forward_pallas.1} parent=0 // pred_check_branch
    %9 = sbr.rel (0) target = $region5
  $region4: #{layernorm_forward_pallas.1} parent=0 // pred_region
    _
  $region5: #{layernorm_forward_pallas.1} parent=0 // pred_fallthru
    _
  // Predicated region
  $region6: #{layernorm_forward_pallas.1} parent=0 // pred_check
    _
  $region7: #{layernorm_forward_pallas.1} parent=0 // pred_check_branch
    %11 = sbr.rel (0) target = $region9
  $region8: #{layernorm_forward_pallas.1} parent=0 // pred_region
    _
  $region9: #{layernorm_forward_pallas.1} parent=0 // pred_fallthru
    _
  // Predicated region
  $region10: #{layernorm_forward_pallas.1} parent=0 // pred_check
    _
  $region11: #{layernorm_forward_pallas.1} parent=0 // pred_check_branch
    %13 = sbr.rel (0) target = $region13
  $region12: #{layernorm_forward_pallas.1} parent=0 // pred_region
    _
  $region13: #{layernorm_forward_pallas.1} parent=0 // pred_fallthru
    _
  %v14 = vld [vmem:[%s0] sm:$0xff]
  %v15 = vld [vmem:[%s0 + $0x8] sm:$0xff]
  %18 = vst [vmem:[#allocation1] ss:$2 sm:$0xff] %v14
  %v19 = vld.sshfl [vmem:[#allocation1] sm:$0xff pattern:$0x75316420]
  %v20 = vld.sshfl [vmem:[#allocation1 + $0x8] sm:$0xff pattern:$0x75316420]
  %s21 = scalar_lea.vmem [#allocation1], 16
  %22 = vst [vmem:[%s21] ss:$2 sm:$0xff] %v15
  %v23 = vld.sshfl [vmem:[#allocation1 + $0x10] sm:$0xff pattern:$0x75316420]
  %v24 = vld.sshfl [vmem:[#allocation1 + $0x18] sm:$0xff pattern:$0x75316420]
  %vm29 = vcmask 1043456
  %v30 = vsel %vm29, %v19, 0.0
  %v31 = vrot.slane %v30, 4
  %v32 = vadd.f32 %v30, %v31
  %v33 = vrot.slane %v32, 2
  %v34 = vadd.f32 %v32, %v33
  %v35 = vrot.slane %v34, 1
  %v36 = vadd.f32 %v34, %v35
  %v37 = vsel %vm29, %v20, 0.0
  %v38 = vrot.slane %v37, 4
  %v39 = vadd.f32 %v37, %v38
  %v40 = vrot.slane %v39, 2
  %v41 = vadd.f32 %v39, %v40
  %v42 = vrot.slane %v41, 1
  %v43 = vadd.f32 %v41, %v42
  %v44 = vsel %vm29, %v23, 0.0
  %v45 = vrot.slane %v44, 4
  %v46 = vadd.f32 %v44, %v45
  %v47 = vrot.slane %v46, 2
  %v48 = vadd.f32 %v46, %v47
  %v49 = vrot.slane %v48, 1
  %v50 = vadd.f32 %v48, %v49
  %v51 = vsel %vm29, %v24, 0.0
  %v52 = vrot.slane %v51, 4
  %v53 = vadd.f32 %v51, %v52
  %v54 = vrot.slane %v53, 2
  %v55 = vadd.f32 %v53, %v54
  %v56 = vrot.slane %v55, 1
  %v57 = vadd.f32 %v55, %v56
  %v58 = vrcp.pop 4.0
  %v59 = vmul.f32 4.0, %v58
  %v60 = vsub.f32 1.0, %v59
  %v61 = vmul.f32 %v58, %v60
  %v62 = vadd.f32 %v58, %v61
  %vm63 = vweird.f32 %v58
  %v64 = vsel %vm63, %v58, %v62
  %v65 = vmul.f32 %v36, %v64
  %v66 = vmul.f32 %v43, %v64
  %v67 = vmul.f32 %v50, %v64
  %v68 = vmul.f32 %v57, %v64
  %v73 = vrot.slane %v66, 4
  %v74 = vrot.slane %v68, 4
  %v75 = vsel %vm29, %v65, %v73
  %v76 = vsel %vm29, %v67, %v74
  %v79 = vsub.f32 %v14, %v75
  %v80 = vsub.f32 %v15, %v76
  %v81 = vmul.f32 %v79, %v79
  %v82 = vmul.f32 %v80, %v80
  %85 = vst [vmem:[#allocation1] ss:$2 sm:$0xff] %v81
  %v86 = vld.sshfl [vmem:[#allocation1] sm:$0xff pattern:$0x75316420]
  %v87 = vld.sshfl [vmem:[#allocation1 + $0x8] sm:$0xff pattern:$0x75316420]
  %s88 = scalar_lea.vmem [#allocation1], 16
  %89 = vst [vmem:[%s88] ss:$2 sm:$0xff] %v82
  %v90 = vld.sshfl [vmem:[#allocation1 + $0x10] sm:$0xff pattern:$0x75316420]
  %v91 = vld.sshfl [vmem:[#allocation1 + $0x18] sm:$0xff pattern:$0x75316420]
  %v96 = vsel %vm29, %v86, 0.0
  %v97 = vrot.slane %v96, 4
  %v98 = vadd.f32 %v96, %v97
  %v99 = vrot.slane %v98, 2
  %v100 = vadd.f32 %v98, %v99
  %v101 = vrot.slane %v100, 1
  %v102 = vadd.f32 %v100, %v101
  %v103 = vsel %vm29, %v87, 0.0
  %v104 = vrot.slane %v103, 4
  %v105 = vadd.f32 %v103, %v104
  %v106 = vrot.slane %v105, 2
  %v107 = vadd.f32 %v105, %v106
  %v108 = vrot.slane %v107, 1
  %v109 = vadd.f32 %v107, %v108
  %v110 = vsel %vm29, %v90, 0.0
  %v111 = vrot.slane %v110, 4
  %v112 = vadd.f32 %v110, %v111
  %v113 = vrot.slane %v112, 2
  %v114 = vadd.f32 %v112, %v113
  %v115 = vrot.slane %v114, 1
  %v116 = vadd.f32 %v114, %v115
  %v117 = vsel %vm29, %v91, 0.0
  %v118 = vrot.slane %v117, 4
  %v119 = vadd.f32 %v117, %v118
  %v120 = vrot.slane %v119, 2
  %v121 = vadd.f32 %v119, %v120
  %v122 = vrot.slane %v121, 1
  %v123 = vadd.f32 %v121, %v122
  %v124 = vmul.f32 %v102, %v64
  %v125 = vmul.f32 %v109, %v64
  %v126 = vmul.f32 %v116, %v64
  %v127 = vmul.f32 %v123, %v64
  %v128 = vadd.f32 %v124, 1e-05
  %v129 = vadd.f32 %v125, 1e-05
  %v130 = vadd.f32 %v126, 1e-05
  %v131 = vadd.f32 %v127, 1e-05
  %v132 = vrsqrt.pop %v128
  %v133 = vmul.f32 %v132, %v128
  %v134 = vmul.f32 %v133, %v132
  %v135 = vmul.f32 0.5, %v134
  %v136 = vsub.f32 1.5, %v135
  %v137 = vmul.f32 %v132, %v136
  %vm138 = vweird.f32 %v128
  %vm139 = vweird.f32 %v132
  %vm140 = vmor %vm138, %vm139
  %v141 = vsel %vm140, %v132, %v137
  %v142 = vrsqrt.pop %v129
  %v143 = vmul.f32 %v142, %v129
  %v144 = vmul.f32 %v143, %v142
  %v145 = vmul.f32 0.5, %v144
  %v146 = vsub.f32 1.5, %v145
  %v147 = vmul.f32 %v142, %v146
  %vm148 = vweird.f32 %v129
  %vm149 = vweird.f32 %v142
  %vm150 = vmor %vm148, %vm149
  %v151 = vsel %vm150, %v142, %v147
  %v152 = vrsqrt.pop %v130
  %v153 = vmul.f32 %v152, %v130
  %v154 = vmul.f32 %v153, %v152
  %v155 = vmul.f32 0.5, %v154
  %v156 = vsub.f32 1.5, %v155
  %v157 = vmul.f32 %v152, %v156
  %vm158 = vweird.f32 %v130
  %vm159 = vweird.f32 %v152
  %vm160 = vmor %vm158, %vm159
  %v161 = vsel %vm160, %v152, %v157
  %v162 = vrsqrt.pop %v131
  %v163 = vmul.f32 %v162, %v131
  %v164 = vmul.f32 %v163, %v162
  %v165 = vmul.f32 0.5, %v164
  %v166 = vsub.f32 1.5, %v165
  %v167 = vmul.f32 %v162, %v166
  %vm168 = vweird.f32 %v131
  %vm169 = vweird.f32 %v162
  %vm170 = vmor %vm168, %vm169
  %v171 = vsel %vm170, %v162, %v167
  %v172 = vld [vmem:[%s1] sm:$0xf]
  %v173 = vld [vmem:[%s2] sm:$0xf]
  %v178 = vrot.slane %v151, 4
  %v179 = vrot.slane %v171, 4
  %v180 = vsel %vm29, %v141, %v178
  %v181 = vsel %vm29, %v161, %v179
  %v184 = vmul.f32 %v79, %v180
  %v185 = vmul.f32 %v80, %v181
  %187 = vset.pattern.permute.xlu0 0
  %188 = vperm.xlu0 %187, %v172
  %v189 = vpop.permute.xlu0 %188
  %v191 = vunpack.c.l.s4 839922192
  %v192 = vunpack.c.0.s8 %v191
  %v193 = vperm.slane %v189, %v192
  %v195 = vmul.f32 %v184, %v193
  %v196 = vmul.f32 %v185, %v193
  %198 = vset.pattern.permute.xlu0 0
  %199 = vperm.xlu0 %198, %v173
  %v200 = vpop.permute.xlu0 %199
  %v202 = vunpack.c.l.s4 839922192
  %v203 = vunpack.c.0.s8 %v202
  %v204 = vperm.slane %v200, %v203
  %v206 = vadd.f32 %v195, %v204
  %v207 = vadd.f32 %v196, %v204
  %208 = vst [vmem:[%s3] sm:$0xff] %v206
  %209 = vst [vmem:[%s3 + $0x8] sm:$0xff] %v207
  // Predicated region
  $region14: #{layernorm_forward_pallas.1} parent=0 // pred_check
    _
  $region15: #{layernorm_forward_pallas.1} parent=0 // pred_check_branch
    %211 = sbr.rel (0) target = $region17
  $region16: #{layernorm_forward_pallas.1} parent=0 // pred_region
    _
  $region17: #{layernorm_forward_pallas.1} parent=0 // pred_fallthru
    _
  // Predicated region
  $region18: #{layernorm_forward_pallas.1} parent=0 // pred_check
    _
  $region19: #{layernorm_forward_pallas.1} parent=0 // pred_check_branch
    %213 = sbr.rel (0) target = $region21
  $region20: #{layernorm_forward_pallas.1} parent=0 // pred_region
    _
  $region21: #{layernorm_forward_pallas.1} parent=0 // pred_fallthru
    _

</llo_original>
